<compile_context>
chip_gen: v7x
topology: tpu7x:2x2x1
jax: 0.10.0
libtpu: 0.0.40
codegen_flags: <defaults>
</compile_context>

<pallas_src>
from functools import partial

import numpy as np
import jax
import jax.numpy as jnp
from jax.experimental import pallas as pl
from jax.experimental.pallas import tpu as pltpu


def _round_up(n, m):
    return ((n + m - 1) // m) * m


# ---------------------------------------------------------------------------
# Kernel: three lane-dense matmuls (layer1+skip fused, block-diag layer2, output).
# ---------------------------------------------------------------------------
def _fused_mlp_kernel(x_ref, w1_ref, b1_ref, w2_ref, b2_ref, wo_ref, bo_ref,
                      o_ref, *, hp):
    x = x_ref[...]                                                     # [TB, n_in]
    # Layer 1 and the rank-1 skip path share one matmul; split at the 128-aligned
    # lane boundary `hp` (free, no cross-tile copy).
    pre = jnp.dot(x, w1_ref[...],
                  preferred_element_type=jnp.float32) + b1_ref[...]    # [TB, HP+NOP]
    h = jnp.tanh(pre[:, :hp]).astype(w2_ref.dtype)                     # [TB, HP]
    skip = pre[:, hp:]                                                 # [TB, NOP] (f32)

    h = jnp.tanh(jnp.dot(h, w2_ref[...],
                         preferred_element_type=jnp.float32) + b2_ref[...])
    h = h.astype(wo_ref.dtype)                                         # [TB, HP]

    out = jnp.dot(h, wo_ref[...],
                  preferred_element_type=jnp.float32) + bo_ref[...] + skip
    o_ref[...] = out.astype(o_ref.dtype)


# ---------------------------------------------------------------------------
# Wrapper-time fusion of the M parallel models into one set of weights.
# ---------------------------------------------------------------------------
def fuse_params(params, compute_dtype=jnp.bfloat16):
    M, n_in, H = params["w1"].shape
    n_outs = params["wo"].shape[2]
    MH = M * H
    HP = _round_up(MH, 128)          # padded fused hidden dim (lane-dense)
    NOP = _round_up(n_outs, 128)     # padded output dim (lane-dense stores)

    pre = params["prescale"][:, 0, :]     # [M, n_in]
    skip = params["skip"][:, 0, :]        # [M, n_in]
    mg = params["mg"][:, 0, :]            # [M, n_outs]

    # Layer 1: fold prescale into rows, concatenate along hidden axis (model-major),
    # then column-append the rank-1 skip matrix after the 128-aligned HP boundary.
    w1c = (params["w1"] * pre[:, :, None]).transpose(1, 0, 2).reshape(n_in, MH)
    v = jnp.sum(skip * pre, axis=0)                                    # [n_in]
    w1e = jnp.zeros((n_in, HP + NOP), jnp.float32)
    w1e = w1e.at[:, :MH].set(w1c)
    w1e = w1e.at[:, HP:HP + n_outs].set(
        jnp.broadcast_to(v[:, None], (n_in, n_outs)))
    b1e = jnp.zeros((1, HP + NOP), jnp.float32)
    b1e = b1e.at[0, :MH].set(params["b1"][:, 0, :].reshape(MH))

    # Layer 2: block-diagonal, zero-padded. (See NOTE(scale) in header.)
    w2f = jnp.zeros((HP, HP), jnp.float32)
    for m in range(M):
        w2f = w2f.at[m * H:(m + 1) * H, m * H:(m + 1) * H].set(params["w2"][m])
    b2f = jnp.zeros((1, HP), jnp.float32)
    b2f = b2f.at[0, :MH].set(params["b2"][:, 0, :].reshape(MH))

    # Output layer: fold main_gain, concatenate along the contracting axis;
    # the single matmul then sums over the models for free.
    woc = (params["wo"] * mg[:, None, :]).reshape(MH, n_outs)
    wof = jnp.zeros((HP, NOP), jnp.float32).at[:MH, :n_outs].set(woc)
    bof = jnp.zeros((1, NOP), jnp.float32).at[0, :n_outs].set(
        jnp.sum(mg * params["bo"][:, 0, :], axis=0))

    cd = compute_dtype
    return dict(w1=w1e.astype(cd), b1=b1e,          # biases stay f32 (accumulate in f32)
                w2=w2f.astype(cd), b2=b2f,
                wo=wof.astype(cd), bo=bof,
                n_outs=n_outs, hp=HP, nop=NOP)


def parallel_mlp_pallas(x, fused, batch_tile=512, trim_output=True):
    """x: [B, n_in]. fused: dict from fuse_params. Returns [B, n_outs] f32
    (or the NOP-padded [B, NOP] if trim_output=False; padded columns are zero)."""
    B, n_in = x.shape
    HP, NOP, n_outs = fused["hp"], fused["nop"], fused["n_outs"]
    compute_dtype = fused["w1"].dtype
    x = x.astype(compute_dtype)

    # Batch tile: prefer >= 2 grid steps so v7x's second TensorCore gets work
    # (the "parallel" grid axis is what shards across TCs); keep tb a sublane
    # multiple and zero-pad the batch remainder.
    if B > batch_tile:
        tb = batch_tile
    elif B > 8:
        tb = _round_up((B + 1) // 2, 8)
    else:
        tb = B
    Bp = _round_up(B, tb)
    if Bp != B:
        x = jnp.concatenate([x, jnp.zeros((Bp - B, n_in), x.dtype)], axis=0)
    grid = (Bp // tb,)

    # VMEM budget: resident weights (single copy) + double-buffered x/out tiles.
    weight_bytes = sum(int(a.size) * a.dtype.itemsize
                       for a in (fused["w1"], fused["b1"], fused["w2"],
                                 fused["b2"], fused["wo"], fused["bo"]))
    stream_bytes = tb * (n_in * x.dtype.itemsize + NOP * 4)
    vmem_limit = int(min(max(weight_bytes + 4 * stream_bytes, 32 << 20), 112 << 20))

    cost = pl.CostEstimate(
        flops=int(2 * Bp * (n_in * (HP + NOP) + HP * HP + HP * NOP)),
        transcendentals=int(2 * Bp * HP),
        bytes_accessed=int(Bp * n_in * x.dtype.itemsize + Bp * NOP * 4 + weight_bytes),
    )

    # Resident weights: whole array, single VMEM copy (no per-step double buffering).
    def resident():
        return pl.BlockSpec(memory_space=pltpu.MemorySpace.VMEM)

    out = pl.pallas_call(
        partial(_fused_mlp_kernel, hp=HP),
        out_shape=jax.ShapeDtypeStruct((Bp, NOP), jnp.float32),
        grid=grid,
        in_specs=[
            pl.BlockSpec((tb, n_in), lambda i: (i, 0)),   # x: batch-tiled, pipelined
            resident(),                                   # W1_ext  [n_in, HP+NOP]
            resident(),                                   # b1_ext  [1, HP+NOP]
            resident(),                                   # W2      [HP, HP]
            resident(),                                   # b2      [1, HP]
            resident(),                                   # Wo'     [HP, NOP]
            resident(),                                   # bo'     [1, NOP]
        ],
        out_specs=pl.BlockSpec((tb, NOP), lambda i: (i, 0)),
        compiler_params=pltpu.CompilerParams(
            dimension_semantics=("parallel",),
            vmem_limit_bytes=vmem_limit),
        cost_estimate=cost,
    )(x, fused["w1"], fused["b1"], fused["w2"], fused["b2"],
      fused["wo"], fused["bo"])

    if Bp != B:
        out = out[:B]
    if trim_output:
        out = out[:, :n_outs]
    return out


# ---------------------------------------------------------------------------
# Plain-JAX reference matching the PyTorch ParallelMLP(shared_input=True) forward.
# ---------------------------------------------------------------------------
def parallel_mlp_ref(x, params):
    outs = []
    M = params["w1"].shape[0]
    for m in range(M):
        xm = x * params["prescale"][m, 0]
        x_res = jnp.sum(params["skip"][m, 0] * xm, axis=-1, keepdims=True)
        h = jnp.tanh(xm @ params["w1"][m] + params["b1"][m, 0])
        h = jnp.tanh(h @ params["w2"][m] + params["b2"][m, 0])
        o = params["mg"][m, 0] * (h @ params["wo"][m] + params["bo"][m, 0]) + x_res
        outs.append(o)
    return jnp.stack(outs, axis=0).sum(axis=0)


def make_params(key, n_models, n_in, n_hidden, n_outs):
    """Deterministic parameters mimicking nn.Linear default init per parallel MLP,
    with non-trivial prescaling / skip_gain / main_gain buffers."""
    def linear(k, fan_in, fan_out):
        kw, kb = jax.random.split(k)
        bound = 1.0 / np.sqrt(fan_in)
        w = jax.random.uniform(kw, (fan_in, fan_out), jnp.float32, -bound, bound)
        b = jax.random.uniform(kb, (1, fan_out), jnp.float32, -bound, bound)
        return w, b

    w1s, b1s, w2s, b2s, wos, bos = [], [], [], [], [], []
    pres, skips, mgs = [], [], []
    keys = jax.random.split(key, n_models)
    for m in range(n_models):
        k1, k2, k3 = jax.random.split(keys[m], 3)
        w1, b1 = linear(k1, n_in, n_hidden)
        w2, b2 = linear(k2, n_hidden, n_hidden)
        wo, bo = linear(k3, n_hidden, n_outs)
        w1s.append(w1); b1s.append(b1)
        w2s.append(w2); b2s.append(b2)
        wos.append(wo); bos.append(bo)
        pres.append(jnp.linspace(0.5, 1.5, n_in, dtype=jnp.float32)[None, :])
        skips.append(jnp.full((1, n_in), 0.1 * (m + 1), jnp.float32))
        mgs.append(jnp.full((1, n_outs), 1.0 + 0.25 * m, jnp.float32))

    stack = lambda xs: jnp.stack(xs, axis=0)
    return dict(
        w1=stack(w1s), b1=stack(b1s),
        w2=stack(w2s), b2=stack(b2s),
        wo=stack(wos), bo=stack(bos),
        prescale=stack(pres), skip=stack(skips), mg=stack(mgs),
    )


if __name__ == "__main__":
    B, n_in, n_hidden, n_outs, n_models = 8, 8, 32, 4, 3

    key = jax.random.PRNGKey(0)
    kx, kp = jax.random.split(key)
    x = jax.random.normal(kx, (B, n_in), dtype=jnp.float32)
    params = make_params(kp, n_models, n_in, n_hidden, n_outs)
    ref = np.asarray(parallel_mlp_ref(x, params))

    # 1) f32 path: exact structural check of the fusion algebra.
    fused_f32 = fuse_params(params, compute_dtype=jnp.float32)
    out_f32 = parallel_mlp_pallas(x, fused_f32, trim_output=False)
    out_f32 = jax.block_until_ready(out_f32)
    np.testing.assert_allclose(np.asarray(out_f32)[:, :n_outs], ref,
                               rtol=1e-3, atol=1e-3)

    # 2) bf16 weights/activations (MXU-native on v5e/v6e/v7x), f32 accumulation.
    fused_bf16 = fuse_params(params, compute_dtype=jnp.bfloat16)
    out_bf16 = parallel_mlp_pallas(x, fused_bf16, trim_output=False)
    out_bf16 = jax.block_until_ready(out_bf16)
    np.testing.assert_allclose(np.asarray(out_bf16)[:, :n_outs], ref,
                               rtol=5e-2, atol=7e-2)

    print("KERNEL_OK")
</pallas_src>

<mosaic_0001>
module attributes {stable_mosaic.version = 11 : i64} {
  func.func @_fused_mlp_kernel(%arg0: i32, %arg1: memref<8x8xf32, #tpu.memory_space<vmem>>, %arg2: memref<8x256xf32, #tpu.memory_space<vmem>>, %arg3: memref<1x256xf32, #tpu.memory_space<vmem>>, %arg4: memref<128x128xf32, #tpu.memory_space<vmem>>, %arg5: memref<1x128xf32, #tpu.memory_space<vmem>>, %arg6: memref<128x128xf32, #tpu.memory_space<vmem>>, %arg7: memref<1x128xf32, #tpu.memory_space<vmem>>, %arg8: memref<8x128xf32, #tpu.memory_space<vmem>>) attributes {dimension_semantics = [#tpu.dimension_semantics<parallel>], iteration_bounds = array<i64: 1>, scalar_prefetch = 0 : i64, scratch_operands = 0 : i64, tpu.core_type = #tpu.core_type<tc>, window_params = [{transform_indices = @transform_0, window_bounds = array<i64: 8, 8>}, {pipeline_mode = #tpu.pipeline_mode<synchronous>, transform_indices = @transform_1, window_bounds = array<i64: 8, 256>}, {pipeline_mode = #tpu.pipeline_mode<synchronous>, transform_indices = @transform_2, window_bounds = array<i64: 1, 256>}, {pipeline_mode = #tpu.pipeline_mode<synchronous>, transform_indices = @transform_3, window_bounds = array<i64: 128, 128>}, {pipeline_mode = #tpu.pipeline_mode<synchronous>, transform_indices = @transform_4, window_bounds = array<i64: 1, 128>}, {pipeline_mode = #tpu.pipeline_mode<synchronous>, transform_indices = @transform_5, window_bounds = array<i64: 128, 128>}, {pipeline_mode = #tpu.pipeline_mode<synchronous>, transform_indices = @transform_6, window_bounds = array<i64: 1, 128>}, {transform_indices = @transform_7, window_bounds = array<i64: 8, 128>}]} {
    %c0 = arith.constant 0 : index
    %c0_0 = arith.constant 0 : index
    %0 = vector.load %arg1[%c0, %c0_0] : memref<8x8xf32, #tpu.memory_space<vmem>>, vector<8x8xf32>
    %c0_1 = arith.constant 0 : index
    %c0_2 = arith.constant 0 : index
    %1 = vector.load %arg2[%c0_1, %c0_2] : memref<8x256xf32, #tpu.memory_space<vmem>>, vector<8x256xf32>
    %cst = arith.constant dense<0.000000e+00> : vector<8x256xf32>
    %2 = tpu.matmul %0, %1, %cst {dimension_numbers = #tpu.dot_dimension_numbers<[1], [0], [0], [1], [0, 0, 1, 1], [], []>} : vector<8x8xf32>, vector<8x256xf32>, vector<8x256xf32> -> vector<8x256xf32>
    %c0_3 = arith.constant 0 : index
    %c0_4 = arith.constant 0 : index
    %3 = vector.load %arg3[%c0_3, %c0_4] : memref<1x256xf32, #tpu.memory_space<vmem>>, vector<1x256xf32>
    %4 = vector.broadcast %3 : vector<1x256xf32> to vector<8x256xf32>
    %5 = arith.addf %2, %4 : vector<8x256xf32>
    %6 = vector.extract_strided_slice %5 {offsets = [0, 0], sizes = [8, 128], strides = [1, 1]} : vector<8x256xf32> to vector<8x128xf32>
    %7 = math.tanh %6 : vector<8x128xf32>
    %8 = vector.extract_strided_slice %5 {offsets = [0, 128], sizes = [8, 128], strides = [1, 1]} : vector<8x256xf32> to vector<8x128xf32>
    %c0_5 = arith.constant 0 : index
    %c0_6 = arith.constant 0 : index
    %9 = vector.load %arg4[%c0_5, %c0_6] : memref<128x128xf32, #tpu.memory_space<vmem>>, vector<128x128xf32>
    %cst_7 = arith.constant dense<0.000000e+00> : vector<8x128xf32>
    %10 = tpu.matmul %7, %9, %cst_7 {dimension_numbers = #tpu.dot_dimension_numbers<[1], [0], [0], [1], [0, 0, 1, 1], [], []>} : vector<8x128xf32>, vector<128x128xf32>, vector<8x128xf32> -> vector<8x128xf32>
    %c0_8 = arith.constant 0 : index
    %c0_9 = arith.constant 0 : index
    %11 = vector.load %arg5[%c0_8, %c0_9] : memref<1x128xf32, #tpu.memory_space<vmem>>, vector<1x128xf32>
    %12 = vector.broadcast %11 : vector<1x128xf32> to vector<8x128xf32>
    %13 = arith.addf %10, %12 : vector<8x128xf32>
    %14 = math.tanh %13 : vector<8x128xf32>
    %c0_10 = arith.constant 0 : index
    %c0_11 = arith.constant 0 : index
    %15 = vector.load %arg6[%c0_10, %c0_11] : memref<128x128xf32, #tpu.memory_space<vmem>>, vector<128x128xf32>
    %cst_12 = arith.constant dense<0.000000e+00> : vector<8x128xf32>
    %16 = tpu.matmul %14, %15, %cst_12 {dimension_numbers = #tpu.dot_dimension_numbers<[1], [0], [0], [1], [0, 0, 1, 1], [], []>} : vector<8x128xf32>, vector<128x128xf32>, vector<8x128xf32> -> vector<8x128xf32>
    %c0_13 = arith.constant 0 : index
    %c0_14 = arith.constant 0 : index
    %17 = vector.load %arg7[%c0_13, %c0_14] : memref<1x128xf32, #tpu.memory_space<vmem>>, vector<1x128xf32>
    %18 = vector.broadcast %17 : vector<1x128xf32> to vector<8x128xf32>
    %19 = arith.addf %16, %18 : vector<8x128xf32>
    %20 = arith.addf %19, %8 : vector<8x128xf32>
    %c0_15 = arith.constant 0 : index
    %c0_16 = arith.constant 0 : index
    %21 = vector.load %arg8[%c0_15, %c0_16] : memref<8x128xf32, #tpu.memory_space<vmem>>, vector<8x128xf32>
    tpu.vector_store %arg8[%c0_15, %c0_16], %20 {strides = array<i32>} : memref<8x128xf32, #tpu.memory_space<vmem>>, vector<8x128xf32>,
    return
  }
  func.func @transform_0(%arg0: i32) -> (i32, i32) {
    %c0_i32 = arith.constant 0 : i32
    %c0_i32_0 = arith.constant 0 : i32
    return %arg0, %c0_i32 : i32, i32
  }
  func.func @transform_1(%arg0: i32) -> (i32, i32) {
    %c0_i32 = arith.constant 0 : i32
    %c0_i32_0 = arith.constant 0 : i32
    %c0_i32_1 = arith.constant 0 : i32
    return %c0_i32, %c0_i32_0 : i32, i32
  }
  func.func @transform_2(%arg0: i32) -> (i32, i32) {
    %c0_i32 = arith.constant 0 : i32
    %c0_i32_0 = arith.constant 0 : i32
    %c0_i32_1 = arith.constant 0 : i32
    return %c0_i32, %c0_i32_0 : i32, i32
  }
  func.func @transform_3(%arg0: i32) -> (i32, i32) {
    %c0_i32 = arith.constant 0 : i32
    %c0_i32_0 = arith.constant 0 : i32
    %c0_i32_1 = arith.constant 0 : i32
    return %c0_i32, %c0_i32_0 : i32, i32
  }
  func.func @transform_4(%arg0: i32) -> (i32, i32) {
    %c0_i32 = arith.constant 0 : i32
    %c0_i32_0 = arith.constant 0 : i32
    %c0_i32_1 = arith.constant 0 : i32
    return %c0_i32, %c0_i32_0 : i32, i32
  }
  func.func @transform_5(%arg0: i32) -> (i32, i32) {
    %c0_i32 = arith.constant 0 : i32
    %c0_i32_0 = arith.constant 0 : i32
    %c0_i32_1 = arith.constant 0 : i32
    return %c0_i32, %c0_i32_0 : i32, i32
  }
  func.func @transform_6(%arg0: i32) -> (i32, i32) {
    %c0_i32 = arith.constant 0 : i32
    %c0_i32_0 = arith.constant 0 : i32
    %c0_i32_1 = arith.constant 0 : i32
    return %c0_i32, %c0_i32_0 : i32, i32
  }
  func.func @transform_7(%arg0: i32) -> (i32, i32) {
    %c0_i32 = arith.constant 0 : i32
    %c0_i32_0 = arith.constant 0 : i32
    return %arg0, %c0_i32 : i32, i32
  }
}

</mosaic_0001>

<llo_original>
// kernel: tpu_custom_call.1
$region0: #{tpu_custom_call.1}
  #allocation0 [shape = 'u32[]', space=smem, size = 0x4, offset = 0x4, fixed_abs, tag = 'smem constant byte address 0x4 - core index']
  #allocation1 [shape = 'u32[144,128]{1,0:T(1,128)}', space=vmem, size = 0x12000, scoped, tag = 'internal scratch']
  %s0 = inlined_call_operand.hbm [shape: f32[8,8], index: 0, kind: input, shape index: {}]
  %s1 = inlined_call_operand.hbm [shape: f32[8,256], index: 1, kind: input, shape index: {}]
  %s2 = inlined_call_operand.vmem [shape: f32[1,256], index: 2, kind: input, shape index: {}]
  %s3 = inlined_call_operand.hbm [shape: f32[128,128], index: 3, kind: input, shape index: {}]
  %s4 = inlined_call_operand.vmem [shape: f32[1,128], index: 4, kind: input, shape index: {}]
  %s5 = inlined_call_operand.hbm [shape: f32[128,128], index: 5, kind: input, shape index: {}]
  %s6 = inlined_call_operand.vmem [shape: f32[1,128], index: 6, kind: input, shape index: {}]
  %s7 = inlined_call_operand.hbm [shape: f32[8,128], index: 7, kind: output, shape index: {}]
  %s8 = sld [smem:[#allocation0]]
  $region54: #{tpu_custom_call.1} parent=0
    _
  %s10 = ssub.s32 1, %s8
  %s11 = scalar_select 0, %s10, %s8
  $region1: #{tpu_custom_call.1} parent=0
    #allocation2 [shape = 'u8[4096]{0}', space=vmem, size = 0x1000, scoped, tag = 'input window, operand 0, single buffered']
    #allocation3 [shape = 's32[1]{0}', space=sflag, size = 0x4, scoped, tag = 'scoped memory for tpu_custom_call.1']
    #allocation4 [shape = 's32[1]{0}', space=sflag, size = 0x4, scoped, tag = 'scoped memory for tpu_custom_call.1']
    #allocation5 [shape = 'u8[8192]{0}', space=vmem, size = 0x2000, scoped, tag = 'input window, operand 1, single buffered']
    #allocation6 [shape = 's32[1]{0}', space=sflag, size = 0x4, scoped, tag = 'scoped memory for tpu_custom_call.1']
    #allocation7 [shape = 'u8[65536]{0}', space=vmem, size = 0x10000, scoped, tag = 'input window, operand 3, single buffered']
    #allocation8 [shape = 'u8[65536]{0}', space=vmem, size = 0x10000, scoped, tag = 'input window, operand 5, single buffered']
    #allocation9 [shape = 's32[1]{0}', space=sflag, size = 0x4, scoped, tag = 'scoped memory for tpu_custom_call.1']
    #allocation10 [shape = 'u8[4096]{0}', space=vmem, size = 0x1000, scoped, tag = 'output window, operand 0, single buffered']
    %12 = vsyncpa [#allocation3], 0
    %13 = vsyncpa [#allocation6], 0
    %14 = vsyncpa [#allocation9], 0
    %15 = vsyncpa [#allocation4], 0
    // Predicated region
    $region2: #{tpu_custom_call.1} parent=1 // pred_check
      _
    $region3: #{tpu_custom_call.1} parent=1 // pred_check_branch
      %17 = sbr.rel (0) target = $region5
    $region4: #{tpu_custom_call.1} parent=1 // pred_region
      %s19 = ssub.s32 128, 128
      %20 = vsyncadd [#allocation3], %s19
      %s22 = sshll.u32 [#allocation2], 4
      %s23 = int_to_ptr.vmem [resolvable:$true] %s22
      %25 = dma.hbm_to_vmem [thread:$0]  %s0, 128, %s23, [#allocation3]
    $region5: #{tpu_custom_call.1} parent=1 // pred_fallthru
      _
    // Predicated region
    $region6: #{tpu_custom_call.1} parent=1 // pred_check
      _
    $region7: #{tpu_custom_call.1} parent=1 // pred_check_branch
      %27 = sbr.rel (0) target = $region9
    $region8: #{tpu_custom_call.1} parent=1 // pred_region
      %s29 = ssub.s32 256, 256
      %30 = vsyncadd [#allocation6], %s29
      %s32 = sshll.u32 [#allocation5], 4
      %s33 = int_to_ptr.vmem [resolvable:$true] %s32
      %35 = dma.hbm_to_vmem [thread:$0]  %s1, 256, %s33, [#allocation6]
    $region9: #{tpu_custom_call.1} parent=1 // pred_fallthru
      _
    // Predicated region
    $region10: #{tpu_custom_call.1} parent=1 // pred_check
      _
    $region11: #{tpu_custom_call.1} parent=1 // pred_check_branch
      %37 = sbr.rel (0) target = $region13
    $region12: #{tpu_custom_call.1} parent=1 // pred_region
      _
    $region13: #{tpu_custom_call.1} parent=1 // pred_fallthru
      _
    // Predicated region
    $region14: #{tpu_custom_call.1} parent=1 // pred_check
      _
    $region15: #{tpu_custom_call.1} parent=1 // pred_check_branch
      %39 = sbr.rel (0) target = $region17
    $region16: #{tpu_custom_call.1} parent=1 // pred_region
      %s41 = ssub.s32 2048, 2048
      %42 = vsyncadd [#allocation6], %s41
      %s43 = sshll.u32 [#allocation7], 4
      %s44 = int_to_ptr.vmem [resolvable:$true] %s43
      %49 = dma.hbm_to_vmem [thread:$0]  %s3, 2048, %s44, [#allocation6], 128, 128, 8
    $region17: #{tpu_custom_call.1} parent=1 // pred_fallthru
      _
    // Predicated region
    $region18: #{tpu_custom_call.1} parent=1 // pred_check
      _
    $region19: #{tpu_custom_call.1} parent=1 // pred_check_branch
      %51 = sbr.rel (0) target = $region21
    $region20: #{tpu_custom_call.1} parent=1 // pred_region
      _
    $region21: #{tpu_custom_call.1} parent=1 // pred_fallthru
      _
    // Predicated region
    $region22: #{tpu_custom_call.1} parent=1 // pred_check
      _
    $region23: #{tpu_custom_call.1} parent=1 // pred_check_branch
      %53 = sbr.rel (0) target = $region25
    $region24: #{tpu_custom_call.1} parent=1 // pred_region
      %s55 = ssub.s32 2048, 2048
      %56 = vsyncadd [#allocation9], %s55
      %s57 = sshll.u32 [#allocation8], 4
      %s58 = int_to_ptr.vmem [resolvable:$true] %s57
      %63 = dma.hbm_to_vmem [thread:$0]  %s5, 2048, %s58, [#allocation9], 128, 128, 8
    $region25: #{tpu_custom_call.1} parent=1 // pred_fallthru
      _
    // Predicated region
    $region26: #{tpu_custom_call.1} parent=1 // pred_check
      _
    $region27: #{tpu_custom_call.1} parent=1 // pred_check_branch
      %65 = sbr.rel (0) target = $region29
    $region28: #{tpu_custom_call.1} parent=1 // pred_region
      _
    $region29: #{tpu_custom_call.1} parent=1 // pred_fallthru
      _
    // Predicated region
    $region30: #{tpu_custom_call.1} parent=1 // pred_check
      _
    $region31: #{tpu_custom_call.1} parent=1 // pred_check_branch
      %67 = sbr.rel (0) target = $region33
    $region32: #{tpu_custom_call.1} parent=1 // pred_region
      %68 = dma.done [#allocation3], 128
    $region33: #{tpu_custom_call.1} parent=1 // pred_fallthru
      _
    // Predicated region
    $region34: #{tpu_custom_call.1} parent=1 // pred_check
      _
    $region35: #{tpu_custom_call.1} parent=1 // pred_check_branch
      %70 = sbr.rel (0) target = $region37
    $region36: #{tpu_custom_call.1} parent=1 // pred_region
      %71 = dma.done [#allocation6], 256
    $region37: #{tpu_custom_call.1} parent=1 // pred_fallthru
      _
    // Predicated region
    $region38: #{tpu_custom_call.1} parent=1 // pred_check
      _
    $region39: #{tpu_custom_call.1} parent=1 // pred_check_branch
      %73 = sbr.rel (0) target = $region41
    $region40: #{tpu_custom_call.1} parent=1 // pred_region
      %74 = dma.done [#allocation6], 2048
    $region41: #{tpu_custom_call.1} parent=1 // pred_fallthru
      _
    // Predicated region
    $region42: #{tpu_custom_call.1} parent=1 // pred_check
      _
    $region43: #{tpu_custom_call.1} parent=1 // pred_check_branch
      %76 = sbr.rel (0) target = $region45
    $region44: #{tpu_custom_call.1} parent=1 // pred_region
      %77 = dma.done [#allocation9], 2048
    $region45: #{tpu_custom_call.1} parent=1 // pred_fallthru
      _
    %v78 = vld [vmem:[#allocation2] sm:$0xff]
    %v79 = vld [vmem:[#allocation5] sm:$0xff]
    %v80 = vld [vmem:[#allocation5 + $0x8] sm:$0xff]
    %v81 = vld [vmem:[%s2] sm:$0x3]
    %v83 = vlaneseq
    %v84 = vshrl.u32 %v83, 7
    %v85 = vsub.s32 0, %v84
    %v86 = vrot.slane %v81, %v85
    %v87 = vlaneseq
    %v88 = vshrl.u32 %v87, 7
    %v89 = vsub.s32 1, %v88
    %v90 = vrot.slane %v81, %v89
    %vm93 = vcmask 64512
    %v95 = vsel %vm93, %v78, 0
    %97 = vmatprep.subr.mxu0 %v80
    %98 = vmatpush1.msra.mxu0 %v79
    %99 = vmatprep.subr.mxu0 0.0
    %100 = vmatpush1.msra.mxu0 0.0
    %101 = vmatprep.subr.mxu0 0.0
    %102 = vmatpush1.msra.mxu0 0.0
    %103 = vmatprep.subr.mxu0 0.0
    %104 = vmatpush1.msra.mxu0 0.0
    %105 = vmatprep.subr.mxu0 0.0
    %106 = vmatpush1.msra.mxu0 0.0
    %107 = vmatprep.subr.mxu0 0.0
    %108 = vmatpush1.msra.mxu0 0.0
    %109 = vmatprep.subr.mxu0 0.0
    %110 = vmatpush1.msra.mxu0 0.0
    %111 = vmatprep.subr.mxu0 0.0
    %112 = vmatpush1.msra.mxu0 0.0
    %113 = vmatprep.subr.mxu0 0.0
    %114 = vmatpush1.msra.mxu0 0.0
    %115 = vmatprep.subr.mxu0 0.0
    %116 = vmatpush1.msra.mxu0 0.0
    %117 = vmatprep.subr.mxu0 0.0
    %118 = vmatpush1.msra.mxu0 0.0
    %119 = vmatprep.subr.mxu0 0.0
    %120 = vmatpush1.msra.mxu0 0.0
    %121 = vmatprep.subr.mxu0 0.0
    %122 = vmatpush1.msra.mxu0 0.0
    %123 = vmatprep.subr.mxu0 0.0
    %124 = vmatpush1.msra.mxu0 0.0
    %125 = vmatprep.subr.mxu0 0.0
    %126 = vmatpush1.msra.mxu0 0.0
    %127 = vmatprep.subr.mxu0 0.0
    %128 = vmatpush1.msra.mxu0 0.0
    %129 = vmatprep.subr.mxu0 0.0
    %130 = vmatpush1.msra.mxu0 0.0
    %131 = vmatprep.subr.mxu0 0.0
    %132 = vmatpush1.msra.mxu0 0.0
    %133 = vmatprep.subr.mxu0 0.0
    %134 = vmatpush1.msra.mxu0 0.0
    %135 = vmatprep.subr.mxu0 0.0
    %136 = vmatpush1.msra.mxu0 0.0
    %137 = vmatprep.subr.mxu0 0.0
    %138 = vmatpush1.msra.mxu0 0.0
    %139 = vmatprep.subr.mxu0 0.0
    %140 = vmatpush1.msra.mxu0 0.0
    %141 = vmatprep.subr.mxu0 0.0
    %142 = vmatpush1.msra.mxu0 0.0
    %143 = vmatprep.subr.mxu0 0.0
    %144 = vmatpush1.msra.mxu0 0.0
    %145 = vmatprep.subr.mxu0 0.0
    %146 = vmatpush1.msra.mxu0 0.0
    %147 = vmatprep.subr.mxu0 0.0
    %148 = vmatpush1.msra.mxu0 0.0
    %149 = vmatprep.subr.mxu0 0.0
    %150 = vmatpush1.msra.mxu0 0.0
    %151 = vmatprep.subr.mxu0 0.0
    %152 = vmatpush1.msra.mxu0 0.0
    %153 = vmatprep.subr.mxu0 0.0
    %154 = vmatpush1.msra.mxu0 0.0
    %155 = vmatprep.subr.mxu0 0.0
    %156 = vmatpush1.msra.mxu0 0.0
    %157 = vmatprep.subr.mxu0 0.0
    %158 = vmatpush1.msra.mxu0 0.0
    %159 = vmatprep.subr.mxu0 0.0
    %160 = vmatpush1.msra.mxu0 0.0
    %161 = vmatprep.mubr.f32.mxu0 0.0
    %162 = vmatmul.mubr.f32.gmra.mrb[0].mxu0 %v95
    %v163 = vpop.f32.mrb[0].mxu0
    %v164 = vadd.f32 %v86, %v163
    %v165 = vpop.f32.mrb[0].mxu0
    %v166 = vadd.f32 %v90, %v165
    %167 = vdwg.mxu0
    %v168 = vtanh.pop %v164
    %v169 = vld [vmem:[#allocation7] sm:$0xff]
    %v170 = vld [vmem:[#allocation7 + $0x8] sm:$0xff]
    %v171 = vld [vmem:[#allocation7 + $0x10] sm:$0xff]
    %v172 = vld [vmem:[#allocation7 + $0x18] sm:$0xff]
    %v173 = vld [vmem:[#allocation7 + $0x20] sm:$0xff]
    %v174 = vld [vmem:[#allocation7 + $0x28] sm:$0xff]
    %v175 = vld [vmem:[#allocation7 + $0x30] sm:$0xff]
    %v176 = vld [vmem:[#allocation7 + $0x38] sm:$0xff]
    %v177 = vld [vmem:[#allocation7 + $0x40] sm:$0xff]
    %v178 = vld [vmem:[#allocation7 + $0x48] sm:$0xff]
    %v179 = vld [vmem:[#allocation7 + $0x50] sm:$0xff]
    %v180 = vld [vmem:[#allocation7 + $0x58] sm:$0xff]
    %v181 = vld [vmem:[#allocation7 + $0x60] sm:$0xff]
    %v182 = vld [vmem:[#allocation7 + $0x68] sm:$0xff]
    %v183 = vld [vmem:[#allocation7 + $0x70] sm:$0xff]
    %v184 = vld [vmem:[#allocation7 + $0x78] sm:$0xff]
    %v185 = vld [vmem:[%s4] sm:$0x1]
    %v187 = vlaneseq
    %v188 = vshrl.u32 %v187, 7
    %v189 = vsub.s32 0, %v188
    %v190 = vrot.slane %v185, %v189
    %192 = vmatprep.subr.mxu0 0.0
    %193 = vmatpush1.msra.mxu0 %v169
    %194 = vmatprep.subr.mxu0 0.0
    %195 = vmatpush1.msra.mxu0 %v170
    %196 = vmatprep.subr.mxu0 0.0
    %197 = vmatpush1.msra.mxu0 %v171
    %198 = vmatprep.subr.mxu0 0.0
    %199 = vmatpush1.msra.mxu0 %v172
    %200 = vmatprep.subr.mxu0 0.0
    %201 = vmatpush1.msra.mxu0 %v173
    %202 = vmatprep.subr.mxu0 0.0
    %203 = vmatpush1.msra.mxu0 %v174
    %204 = vmatprep.subr.mxu0 0.0
    %205 = vmatpush1.msra.mxu0 %v175
    %206 = vmatprep.subr.mxu0 0.0
    %207 = vmatpush1.msra.mxu0 %v176
    %208 = vmatprep.subr.mxu0 0.0
    %209 = vmatpush1.msra.mxu0 %v177
    %210 = vmatprep.subr.mxu0 0.0
    %211 = vmatpush1.msra.mxu0 %v178
    %212 = vmatprep.subr.mxu0 0.0
    %213 = vmatpush1.msra.mxu0 %v179
    %214 = vmatprep.subr.mxu0 0.0
    %215 = vmatpush1.msra.mxu0 %v180
    %216 = vmatprep.subr.mxu0 0.0
    %217 = vmatpush1.msra.mxu0 %v181
    %218 = vmatprep.subr.mxu0 0.0
    %219 = vmatpush1.msra.mxu0 %v182
    %220 = vmatprep.subr.mxu0 0.0
    %221 = vmatpush1.msra.mxu0 %v183
    %222 = vmatprep.subr.mxu0 0.0
    %223 = vmatpush1.msra.mxu0 %v184
    %224 = vmatprep.subr.mxu0 0.0
    %225 = vmatpush1.msra.mxu0 0.0
    %226 = vmatprep.subr.mxu0 0.0
    %227 = vmatpush1.msra.mxu0 0.0
    %228 = vmatprep.subr.mxu0 0.0
    %229 = vmatpush1.msra.mxu0 0.0
    %230 = vmatprep.subr.mxu0 0.0
    %231 = vmatpush1.msra.mxu0 0.0
    %232 = vmatprep.subr.mxu0 0.0
    %233 = vmatpush1.msra.mxu0 0.0
    %234 = vmatprep.subr.mxu0 0.0
    %235 = vmatpush1.msra.mxu0 0.0
    %236 = vmatprep.subr.mxu0 0.0
    %237 = vmatpush1.msra.mxu0 0.0
    %238 = vmatprep.subr.mxu0 0.0
    %239 = vmatpush1.msra.mxu0 0.0
    %240 = vmatprep.subr.mxu0 0.0
    %241 = vmatpush1.msra.mxu0 0.0
    %242 = vmatprep.subr.mxu0 0.0
    %243 = vmatpush1.msra.mxu0 0.0
    %244 = vmatprep.subr.mxu0 0.0
    %245 = vmatpush1.msra.mxu0 0.0
    %246 = vmatprep.subr.mxu0 0.0
    %247 = vmatpush1.msra.mxu0 0.0
    %248 = vmatprep.subr.mxu0 0.0
    %249 = vmatpush1.msra.mxu0 0.0
    %250 = vmatprep.subr.mxu0 0.0
    %251 = vmatpush1.msra.mxu0 0.0
    %252 = vmatprep.subr.mxu0 0.0
    %253 = vmatpush1.msra.mxu0 0.0
    %254 = vmatprep.subr.mxu0 0.0
    %255 = vmatpush1.msra.mxu0 0.0
    %256 = vmatprep.mubr.f32.mxu0 0.0
    %257 = vmatmul.mubr.f32.gmra.mrb[0].mxu0 %v168
    %v258 = vpop.f32.mrb[0].mxu0
    %v259 = vadd.f32 %v190, %v258
    %v260 = vpop.f32.mrb[0].mxu0
    %261 = vdwg.mxu0
    %v262 = vtanh.pop %v259
    %v263 = vld [vmem:[#allocation8] sm:$0xff]
    %v264 = vld [vmem:[#allocation8 + $0x8] sm:$0xff]
    %v265 = vld [vmem:[#allocation8 + $0x10] sm:$0xff]
    %v266 = vld [vmem:[#allocation8 + $0x18] sm:$0xff]
    %v267 = vld [vmem:[#allocation8 + $0x20] sm:$0xff]
    %v268 = vld [vmem:[#allocation8 + $0x28] sm:$0xff]
    %v269 = vld [vmem:[#allocation8 + $0x30] sm:$0xff]
    %v270 = vld [vmem:[#allocation8 + $0x38] sm:$0xff]
    %v271 = vld [vmem:[#allocation8 + $0x40] sm:$0xff]
    %v272 = vld [vmem:[#allocation8 + $0x48] sm:$0xff]
    %v273 = vld [vmem:[#allocation8 + $0x50] sm:$0xff]
    %v274 = vld [vmem:[#allocation8 + $0x58] sm:$0xff]
    %v275 = vld [vmem:[#allocation8 + $0x60] sm:$0xff]
    %v276 = vld [vmem:[#allocation8 + $0x68] sm:$0xff]
    %v277 = vld [vmem:[#allocation8 + $0x70] sm:$0xff]
    %v278 = vld [vmem:[#allocation8 + $0x78] sm:$0xff]
    %v279 = vld [vmem:[%s6] sm:$0x1]
    %v281 = vlaneseq
    %v282 = vshrl.u32 %v281, 7
    %v283 = vsub.s32 0, %v282
    %v284 = vrot.slane %v279, %v283
    %286 = vmatprep.subr.mxu0 0.0
    %287 = vmatpush1.msra.mxu0 %v263
    %288 = vmatprep.subr.mxu0 0.0
    %289 = vmatpush1.msra.mxu0 %v264
    %290 = vmatprep.subr.mxu0 0.0
    %291 = vmatpush1.msra.mxu0 %v265
    %292 = vmatprep.subr.mxu0 0.0
    %293 = vmatpush1.msra.mxu0 %v266
    %294 = vmatprep.subr.mxu0 0.0
    %295 = vmatpush1.msra.mxu0 %v267
    %296 = vmatprep.subr.mxu0 0.0
    %297 = vmatpush1.msra.mxu0 %v268
    %298 = vmatprep.subr.mxu0 0.0
    %299 = vmatpush1.msra.mxu0 %v269
    %300 = vmatprep.subr.mxu0 0.0
    %301 = vmatpush1.msra.mxu0 %v270
    %302 = vmatprep.subr.mxu0 0.0
    %303 = vmatpush1.msra.mxu0 %v271
    %304 = vmatprep.subr.mxu0 0.0
    %305 = vmatpush1.msra.mxu0 %v272
    %306 = vmatprep.subr.mxu0 0.0
    %307 = vmatpush1.msra.mxu0 %v273
    %308 = vmatprep.subr.mxu0 0.0
    %309 = vmatpush1.msra.mxu0 %v274
    %310 = vmatprep.subr.mxu0 0.0
    %311 = vmatpush1.msra.mxu0 %v275
    %312 = vmatprep.subr.mxu0 0.0
    %313 = vmatpush1.msra.mxu0 %v276
    %314 = vmatprep.subr.mxu0 0.0
    %315 = vmatpush1.msra.mxu0 %v277
    %316 = vmatprep.subr.mxu0 0.0
    %317 = vmatpush1.msra.mxu0 %v278
    %318 = vmatprep.subr.mxu0 0.0
    %319 = vmatpush1.msra.mxu0 0.0
    %320 = vmatprep.subr.mxu0 0.0
    %321 = vmatpush1.msra.mxu0 0.0
    %322 = vmatprep.subr.mxu0 0.0
    %323 = vmatpush1.msra.mxu0 0.0
    %324 = vmatprep.subr.mxu0 0.0
    %325 = vmatpush1.msra.mxu0 0.0
    %326 = vmatprep.subr.mxu0 0.0
    %327 = vmatpush1.msra.mxu0 0.0
    %328 = vmatprep.subr.mxu0 0.0
    %329 = vmatpush1.msra.mxu0 0.0
    %330 = vmatprep.subr.mxu0 0.0
    %331 = vmatpush1.msra.mxu0 0.0
    %332 = vmatprep.subr.mxu0 0.0
    %333 = vmatpush1.msra.mxu0 0.0
    %334 = vmatprep.subr.mxu0 0.0
    %335 = vmatpush1.msra.mxu0 0.0
    %336 = vmatprep.subr.mxu0 0.0
    %337 = vmatpush1.msra.mxu0 0.0
    %338 = vmatprep.subr.mxu0 0.0
    %339 = vmatpush1.msra.mxu0 0.0
    %340 = vmatprep.subr.mxu0 0.0
    %341 = vmatpush1.msra.mxu0 0.0
    %342 = vmatprep.subr.mxu0 0.0
    %343 = vmatpush1.msra.mxu0 0.0
    %344 = vmatprep.subr.mxu0 0.0
    %345 = vmatpush1.msra.mxu0 0.0
    %346 = vmatprep.subr.mxu0 0.0
    %347 = vmatpush1.msra.mxu0 0.0
    %348 = vmatprep.subr.mxu0 0.0
    %349 = vmatpush1.msra.mxu0 0.0
    %350 = vmatprep.mubr.f32.mxu0 0.0
    %351 = vmatmul.mubr.f32.gmra.mrb[0].mxu0 %v262
    %v352 = vpop.f32.mrb[0].mxu0
    %v353 = vadd.f32 %v284, %v352
    %v354 = vpop.f32.mrb[0].mxu0
    %355 = vdwg.mxu0
    %v356 = vadd.f32 %v353, %v166
    %357 = vst [vmem:[#allocation10] sm:$0xff] %v356
    // Predicated region
    $region46: #{tpu_custom_call.1} parent=1 // pred_check
      _
    $region47: #{tpu_custom_call.1} parent=1 // pred_check_branch
      %359 = sbr.rel (0) target = $region49
    $region48: #{tpu_custom_call.1} parent=1 // pred_region
      %s361 = ssub.s32 128, 128
      %362 = vsyncadd [#allocation4], %s361
      %s364 = sshll.u32 [#allocation10], 4
      %s365 = int_to_ptr.vmem [resolvable:$true] %s364
      %367 = dma.vmem_to_hbm [thread:$0]  %s365, 128, %s7, [#allocation4]
    $region49: #{tpu_custom_call.1} parent=1 // pred_fallthru
      _
    // Predicated region
    $region50: #{tpu_custom_call.1} parent=1 // pred_check
      _
    $region51: #{tpu_custom_call.1} parent=1 // pred_check_branch
      %369 = sbr.rel (0) target = $region53
    $region52: #{tpu_custom_call.1} parent=1 // pred_region
      %370 = dma.done [#allocation4], 128
    $region53: #{tpu_custom_call.1} parent=1 // pred_fallthru
      _
    %371 = vsyncpa [#allocation3], 1
    %372 = vsyncpa [#allocation6], 1
    %373 = vsyncpa [#allocation9], 1
    %374 = vsyncpa [#allocation4], 1

</llo_original>
